<compile_context>
chip_gen: v6e
topology: v6e:2x2x1
jax: 0.10.0
libtpu: 0.0.40
codegen_flags: <defaults>
</compile_context>

<pallas_src>
import functools

import jax
import jax.numpy as jnp
from jax.experimental import pallas as pl
from jax.experimental.pallas import tpu as pltpu

_HALO = 128  # halo width (lane tile); must be >= history length


def _round_up(x, m):
    return (x + m - 1) // m * m


def _glm_history_kernel(xt_ref, xh_ref, w_ref, b_ref, wh_ref, u_ref, out_ref, *, history):
    # xt_ref  : VMEM (D, TM)   float32  -- X^T block for this time tile (lane-dense time)
    # xh_ref  : VMEM (D, 128)  float32  -- X^T halo: the 128 time bins preceding this tile
    # w_ref   : VMEM (1, D)    float32  -- linear weight row
    # b_ref   : SMEM (1,)      float32  -- linear bias
    # wh_ref  : SMEM (H,)      float32  -- history-filter weights (Linear(H, 1, bias=False))
    # u_ref   : VMEM (H, TM)   float32  -- U[0,1) draws, one per (lag column, time bin)
    # out_ref : VMEM (1, TM)   float32  -- sigmoid(z + history term), lane-dense
    i = pl.program_id(0)
    halo = xh_ref.shape[1]
    tm = out_ref.shape[1]

    w = w_ref[...]                                                     # (1, D)
    b = b_ref[0]

    # z / p for this block's time bins (lane-dense (1, TM)); MXU matvec.
    z = jnp.dot(w, xt_ref[...], preferred_element_type=jnp.float32) + b
    p = jax.nn.sigmoid(z)

    # p for the `halo` preceding time bins (for lags that cross the block boundary).
    zh = jnp.dot(w, xh_ref[...], preferred_element_type=jnp.float32) + b
    ph = jax.nn.sigmoid(zh)
    # Block 0 has no real predecessor: lags before t=0 are zero-padded (torch.vstack zeros).
    ph = ph * (i > 0).astype(ph.dtype)

    p_ext = jnp.concatenate([ph, p], axis=1)                           # (1, halo + TM)

    hist = jnp.zeros_like(z)
    for h in range(history):                    # history is a small static int -> unrolled
        lag = history - h
        # lagged_p[j] = p[t - lag] with t = block_start + j (halo / zero fill for j < lag).
        lagged_p = p_ext[:, halo - lag: halo - lag + tm]               # (1, TM) lane shift
        u = u_ref[h:h + 1, :]                                          # (1, TM)
        sample = (u < lagged_p).astype(jnp.float32)                    # Bernoulli(lagged_p)
        hist = hist + wh_ref[h] * sample

    out_ref[...] = jax.nn.sigmoid(z + hist)


def bernoulli_glm_history_forward(x, weight, bias, hist_weight, uniforms, *, block_t=1024):
    """x: (T, n_synapses); weight: (1, n_synapses); bias: (1,);
    hist_weight: (1, H); uniforms: (H, T) U[0,1) draws for the Bernoulli samples.
    Returns (T, 1) float32 probabilities (same as the torch module)."""
    x = jnp.asarray(x, jnp.float32)
    T, D = x.shape
    weight = jnp.asarray(weight, jnp.float32).reshape(1, -1)
    bias = jnp.asarray(bias, jnp.float32).reshape(-1)[:1]
    wh = jnp.asarray(hist_weight, jnp.float32).reshape(-1)
    uniforms = jnp.asarray(uniforms, jnp.float32)
    H = wh.shape[0]
    assert H <= _HALO, "history length must be <= 128"

    # Pad the synapse dim to a lane multiple and pick a lane-aligned time tile
    # (capped so the X^T block stays ~<= 4 MiB of VMEM per buffer).
    D_pad = _round_up(D, 128)
    tm_cap = max(_HALO, (4 * 1024 * 1024 // (D_pad * 4)) // _HALO * _HALO)
    TM = min(_round_up(T, _HALO), _round_up(block_t, _HALO), tm_cap)
    T_pad = _round_up(T, TM)
    halo_blocks = TM // _HALO

    # Lane-dense layout plumbing (wrapper-side transpose / padding).
    xt = jnp.zeros((D_pad, T_pad), jnp.float32).at[:D, :T].set(x.T)
    w_row = jnp.zeros((1, D_pad), jnp.float32).at[:, :D].set(weight)
    # Padded tail time bins get u = 1.0 (=> sample 0); their outputs are sliced off anyway.
    u_pad = jnp.ones((H, T_pad), jnp.float32).at[:, :T].set(uniforms)

    kernel = functools.partial(_glm_history_kernel, history=H)

    out = pl.pallas_call(
        kernel,
        out_shape=jax.ShapeDtypeStruct((1, T_pad), jnp.float32),
        grid=(T_pad // TM,),
        in_specs=[
            pl.BlockSpec((D_pad, TM), lambda i: (0, i)),                      # X^T block
            pl.BlockSpec((D_pad, _HALO),
                         lambda i: (0, jnp.maximum(i * halo_blocks - 1, 0))),  # X^T halo
            pl.BlockSpec((1, D_pad), lambda i: (0, 0)),                       # weight row
            pl.BlockSpec(memory_space=pltpu.MemorySpace.SMEM),                # bias
            pl.BlockSpec(memory_space=pltpu.MemorySpace.SMEM),                # history weights
            pl.BlockSpec((H, TM), lambda i: (0, i)),                          # uniforms
        ],
        out_specs=pl.BlockSpec((1, TM), lambda i: (0, i)),
        compiler_params=pltpu.CompilerParams(
            dimension_semantics=("parallel",)),                               # halo => blocks independent
    )(xt, xt, w_row, bias, wh, u_pad)

    return out[0, :T].reshape(T, 1)


def _reference_forward(x, weight, bias, hist_weight, uniforms):
    """Pure-JAX reference mirroring the PyTorch forward, using the same uniforms."""
    T = x.shape[0]
    H = hist_weight.shape[-1]
    z = x @ weight.T + bias[None, :]                                   # (T, 1)
    p = jax.nn.sigmoid(z)
    p_hist = jnp.concatenate([jnp.zeros((H, 1), jnp.float32), p], axis=0)
    hist = jnp.zeros_like(z)
    for h in range(H):
        lagged = p_hist[h:h + T]
        s = (uniforms[h][:, None] < lagged).astype(jnp.float32)
        hist = hist + hist_weight[0, h] * s
    return jax.nn.sigmoid(z + hist)


if __name__ == "__main__":
    key = jax.random.PRNGKey(0)

    # Module configuration (small, consistent with __init__):
    #   group_names = ["A", "B", "C"], n_neurons_per_group = [32, 32, 64],
    #   n_sessions = 1  -> n_synapses = 128;  history = 4;  T = 300 time bins.
    n_sessions = 1
    n_neurons_per_group = [32, 32, 64]
    n_synapses = n_sessions * sum(n_neurons_per_group)   # 128
    history = 4
    T = 300

    k_x, k_w, k_b, k_h, k_u = jax.random.split(key, 5)

    # Spike-like binary design matrix.
    X = (jax.random.uniform(k_x, (T, n_synapses)) < 0.3).astype(jnp.float32)

    # nn.Linear-style U(-1/sqrt(fan_in), +1/sqrt(fan_in)) init.
    bound = 1.0 / (n_synapses ** 0.5)
    weight = jax.random.uniform(k_w, (1, n_synapses), minval=-bound, maxval=bound,
                                dtype=jnp.float32)
    bias = jax.random.uniform(k_b, (1,), minval=-bound, maxval=bound, dtype=jnp.float32)
    hbound = 1.0 / (history ** 0.5)
    hist_weight = jax.random.uniform(k_h, (1, history), minval=-hbound, maxval=hbound,
                                     dtype=jnp.float32)

    # Uniform draws for the Bernoulli samples (one per lag column per time bin),
    # shared between kernel and reference so they compute the same realization.
    uniforms = jax.random.uniform(k_u, (history, T), dtype=jnp.float32)

    # Use a small time tile so the multi-block + halo path is exercised (3 blocks).
    out = bernoulli_glm_history_forward(X, weight, bias, hist_weight, uniforms, block_t=128)
    out = jax.block_until_ready(out)

    ref = _reference_forward(X, weight, bias, hist_weight, uniforms)

    assert out.shape == (T, 1) and out.dtype == jnp.float32
    assert bool(jnp.all(jnp.isfinite(out)))
    assert bool(jnp.all((out > 0.0) & (out < 1.0)))   # sigmoid output range
    # Allow a tiny fraction of mismatches in case a float-rounding difference flips a
    # Bernoulli comparison that sits exactly on its threshold.
    mismatch = float(jnp.mean((jnp.abs(out - ref) > 1e-4).astype(jnp.float32)))
    assert mismatch < 0.02, f"kernel/reference mismatch fraction: {mismatch}"
    print("KERNEL_OK")
</pallas_src>

<mosaic_0001>
module attributes {stable_mosaic.version = 11 : i64} {
  func.func @_glm_history_kernel(%arg0: i32, %arg1: memref<128x128xf32, #tpu.memory_space<vmem>>, %arg2: memref<128x128xf32, #tpu.memory_space<vmem>>, %arg3: memref<1x128xf32, #tpu.memory_space<vmem>>, %arg4: memref<1xf32, #tpu.memory_space<smem>>, %arg5: memref<4xf32, #tpu.memory_space<smem>>, %arg6: memref<4x128xf32, #tpu.memory_space<vmem>>, %arg7: memref<1x128xf32, #tpu.memory_space<vmem>>) attributes {dimension_semantics = [#tpu.dimension_semantics<parallel>], iteration_bounds = array<i64: 3>, scalar_prefetch = 0 : i64, scratch_operands = 0 : i64, tpu.core_type = #tpu.core_type<tc>, window_params = [{transform_indices = @transform_0, window_bounds = array<i64: 128, 128>}, {transform_indices = @transform_1, window_bounds = array<i64: 128, 128>}, {pipeline_mode = #tpu.pipeline_mode<synchronous>, transform_indices = @transform_2, window_bounds = array<i64: 1, 128>}, {transform_indices = @transform_3, window_bounds = array<i64: 1>}, {transform_indices = @transform_4, window_bounds = array<i64: 4>}, {transform_indices = @transform_5, window_bounds = array<i64: 4, 128>}, {transform_indices = @transform_6, window_bounds = array<i64: 1, 128>}]} {
    %c0 = arith.constant 0 : index
    %c0_0 = arith.constant 0 : index
    %0 = vector.load %arg3[%c0, %c0_0] : memref<1x128xf32, #tpu.memory_space<vmem>>, vector<1x128xf32>
    %c0_1 = arith.constant 0 : index
    %1 = memref.load %arg4[%c0_1] : memref<1xf32, #tpu.memory_space<smem>>
    %c0_2 = arith.constant 0 : index
    %c0_3 = arith.constant 0 : index
    %2 = vector.load %arg1[%c0_2, %c0_3] : memref<128x128xf32, #tpu.memory_space<vmem>>, vector<128x128xf32>
    %cst = arith.constant dense<0.000000e+00> : vector<1x128xf32>
    %3 = tpu.matmul %0, %2, %cst {dimension_numbers = #tpu.dot_dimension_numbers<[1], [0], [0], [1], [0, 0, 1, 1], [], []>} : vector<1x128xf32>, vector<128x128xf32>, vector<1x128xf32> -> vector<1x128xf32>
    %4 = vector.broadcast %1 : f32 to vector<1x128xf32>
    %5 = arith.addf %3, %4 : vector<1x128xf32>
    %6 = arith.negf %5 : vector<1x128xf32>
    %7 = math.exp %6 : vector<1x128xf32>
    %cst_4 = arith.constant 1.000000e+00 : f32
    %8 = vector.broadcast %cst_4 : f32 to vector<1x128xf32>
    %9 = arith.addf %8, %7 : vector<1x128xf32>
    %10 = arith.divf %8, %9 : vector<1x128xf32>
    %c0_5 = arith.constant 0 : index
    %c0_6 = arith.constant 0 : index
    %11 = vector.load %arg2[%c0_5, %c0_6] : memref<128x128xf32, #tpu.memory_space<vmem>>, vector<128x128xf32>
    %cst_7 = arith.constant dense<0.000000e+00> : vector<1x128xf32>
    %12 = tpu.matmul %0, %11, %cst_7 {dimension_numbers = #tpu.dot_dimension_numbers<[1], [0], [0], [1], [0, 0, 1, 1], [], []>} : vector<1x128xf32>, vector<128x128xf32>, vector<1x128xf32> -> vector<1x128xf32>
    %13 = vector.broadcast %1 : f32 to vector<1x128xf32>
    %14 = arith.addf %12, %13 : vector<1x128xf32>
    %15 = arith.negf %14 : vector<1x128xf32>
    %16 = math.exp %15 : vector<1x128xf32>
    %cst_8 = arith.constant 1.000000e+00 : f32
    %17 = vector.broadcast %cst_8 : f32 to vector<1x128xf32>
    %18 = arith.addf %17, %16 : vector<1x128xf32>
    %19 = arith.divf %17, %18 : vector<1x128xf32>
    %c0_i32 = arith.constant 0 : i32
    %20 = arith.cmpi sgt, %arg0, %c0_i32 : i32
    %21 = arith.extui %20 : i1 to i32
    %22 = arith.sitofp %21 : i32 to f32
    %23 = vector.broadcast %22 : f32 to vector<1x128xf32>
    %24 = arith.mulf %19, %23 : vector<1x128xf32>
    %25 = tpu.concatenate %24, %10 in 1 : vector<1x128xf32>, vector<1x128xf32> -> vector<1x256xf32>
    %cst_9 = arith.constant 0.000000e+00 : f32
    %26 = vector.broadcast %cst_9 : f32 to vector<1x128xf32>
    %27 = vector.extract_strided_slice %25 {offsets = [0, 124], sizes = [1, 128], strides = [1, 1]} : vector<1x256xf32> to vector<1x128xf32>
    %c0_10 = arith.constant 0 : index
    %c0_11 = arith.constant 0 : index
    %28 = vector.load %arg6[%c0_10, %c0_11] : memref<4x128xf32, #tpu.memory_space<vmem>>, vector<1x128xf32>
    %29 = arith.cmpf olt, %28, %27 : vector<1x128xf32>
    %30 = arith.extui %29 : vector<1x128xi1> to vector<1x128xi32>
    %31 = arith.sitofp %30 : vector<1x128xi32> to vector<1x128xf32>
    %c0_12 = arith.constant 0 : index
    %32 = memref.load %arg5[%c0_12] : memref<4xf32, #tpu.memory_space<smem>>
    %33 = vector.broadcast %32 : f32 to vector<1x128xf32>
    %34 = arith.mulf %33, %31 : vector<1x128xf32>
    %35 = arith.addf %26, %34 : vector<1x128xf32>
    %36 = vector.extract_strided_slice %25 {offsets = [0, 125], sizes = [1, 128], strides = [1, 1]} : vector<1x256xf32> to vector<1x128xf32>
    %c1 = arith.constant 1 : index
    %c0_13 = arith.constant 0 : index
    %37 = vector.load %arg6[%c1, %c0_13] : memref<4x128xf32, #tpu.memory_space<vmem>>, vector<1x128xf32>
    %38 = arith.cmpf olt, %37, %36 : vector<1x128xf32>
    %39 = arith.extui %38 : vector<1x128xi1> to vector<1x128xi32>
    %40 = arith.sitofp %39 : vector<1x128xi32> to vector<1x128xf32>
    %c1_14 = arith.constant 1 : index
    %41 = memref.load %arg5[%c1_14] : memref<4xf32, #tpu.memory_space<smem>>
    %42 = vector.broadcast %41 : f32 to vector<1x128xf32>
    %43 = arith.mulf %42, %40 : vector<1x128xf32>
    %44 = arith.addf %35, %43 : vector<1x128xf32>
    %45 = vector.extract_strided_slice %25 {offsets = [0, 126], sizes = [1, 128], strides = [1, 1]} : vector<1x256xf32> to vector<1x128xf32>
    %c2 = arith.constant 2 : index
    %c0_15 = arith.constant 0 : index
    %46 = vector.load %arg6[%c2, %c0_15] : memref<4x128xf32, #tpu.memory_space<vmem>>, vector<1x128xf32>
    %47 = arith.cmpf olt, %46, %45 : vector<1x128xf32>
    %48 = arith.extui %47 : vector<1x128xi1> to vector<1x128xi32>
    %49 = arith.sitofp %48 : vector<1x128xi32> to vector<1x128xf32>
    %c2_16 = arith.constant 2 : index
    %50 = memref.load %arg5[%c2_16] : memref<4xf32, #tpu.memory_space<smem>>
    %51 = vector.broadcast %50 : f32 to vector<1x128xf32>
    %52 = arith.mulf %51, %49 : vector<1x128xf32>
    %53 = arith.addf %44, %52 : vector<1x128xf32>
    %54 = vector.extract_strided_slice %25 {offsets = [0, 127], sizes = [1, 128], strides = [1, 1]} : vector<1x256xf32> to vector<1x128xf32>
    %c3 = arith.constant 3 : index
    %c0_17 = arith.constant 0 : index
    %55 = vector.load %arg6[%c3, %c0_17] : memref<4x128xf32, #tpu.memory_space<vmem>>, vector<1x128xf32>
    %56 = arith.cmpf olt, %55, %54 : vector<1x128xf32>
    %57 = arith.extui %56 : vector<1x128xi1> to vector<1x128xi32>
    %58 = arith.sitofp %57 : vector<1x128xi32> to vector<1x128xf32>
    %c3_18 = arith.constant 3 : index
    %59 = memref.load %arg5[%c3_18] : memref<4xf32, #tpu.memory_space<smem>>
    %60 = vector.broadcast %59 : f32 to vector<1x128xf32>
    %61 = arith.mulf %60, %58 : vector<1x128xf32>
    %62 = arith.addf %53, %61 : vector<1x128xf32>
    %63 = arith.addf %5, %62 : vector<1x128xf32>
    %64 = arith.negf %63 : vector<1x128xf32>
    %65 = math.exp %64 : vector<1x128xf32>
    %cst_19 = arith.constant 1.000000e+00 : f32
    %66 = vector.broadcast %cst_19 : f32 to vector<1x128xf32>
    %67 = arith.addf %66, %65 : vector<1x128xf32>
    %68 = arith.divf %66, %67 : vector<1x128xf32>
    %c0_20 = arith.constant 0 : index
    %c0_21 = arith.constant 0 : index
    %69 = vector.load %arg7[%c0_20, %c0_21] : memref<1x128xf32, #tpu.memory_space<vmem>>, vector<1x128xf32>
    tpu.vector_store %arg7[%c0_20, %c0_21], %68 {strides = array<i32>} : memref<1x128xf32, #tpu.memory_space<vmem>>, vector<1x128xf32>,
    return
  }
  func.func @transform_0(%arg0: i32) -> (i32, i32) {
    %c0_i32 = arith.constant 0 : i32
    %c0_i32_0 = arith.constant 0 : i32
    return %c0_i32, %arg0 : i32, i32
  }
  func.func @transform_1(%arg0: i32) -> (i32, i32) {
    %c1_i32 = arith.constant 1 : i32
    %0 = arith.muli %arg0, %c1_i32 : i32
    %c1_i32_0 = arith.constant 1 : i32
    %1 = arith.subi %0, %c1_i32_0 : i32
    %c0_i32 = arith.constant 0 : i32
    %2 = arith.maxsi %1, %c0_i32 : i32
    %c0_i32_1 = arith.constant 0 : i32
    %c0_i32_2 = arith.constant 0 : i32
    return %c0_i32_1, %2 : i32, i32
  }
  func.func @transform_2(%arg0: i32) -> (i32, i32) {
    %c0_i32 = arith.constant 0 : i32
    %c0_i32_0 = arith.constant 0 : i32
    %c0_i32_1 = arith.constant 0 : i32
    return %c0_i32, %c0_i32_0 : i32, i32
  }
  func.func @transform_3(%arg0: i32) -> i32 {
    %c0_i32 = arith.constant 0 : i32
    %c0_i32_0 = arith.constant 0 : i32
    return %c0_i32 : i32
  }
  func.func @transform_4(%arg0: i32) -> i32 {
    %c0_i32 = arith.constant 0 : i32
    %c0_i32_0 = arith.constant 0 : i32
    return %c0_i32 : i32
  }
  func.func @transform_5(%arg0: i32) -> (i32, i32) {
    %c0_i32 = arith.constant 0 : i32
    %c0_i32_0 = arith.constant 0 : i32
    return %c0_i32, %arg0 : i32, i32
  }
  func.func @transform_6(%arg0: i32) -> (i32, i32) {
    %c0_i32 = arith.constant 0 : i32
    %c0_i32_0 = arith.constant 0 : i32
    return %c0_i32, %arg0 : i32, i32
  }
}

</mosaic_0001>

<llo_original>
// kernel: tpu_custom_call.1
$region0: #{tpu_custom_call.1}
  #allocation0 [shape = 'u32[]', space=smem, size = 0x4, offset = 0x4, fixed_abs, tag = 'smem constant byte address 0x4 - core index']
  #allocation1 [shape = 'u32[144,128]{1,0:T(1,128)}', space=vmem, size = 0x12000, scoped, tag = 'internal scratch']
  #allocation2 [shape = 'f32[1]{0:T(128)S(6)}', space=smem, size = 0x200, scoped, tag = 'scoped memory for tpu_custom_call.1']
  %s0 = inlined_call_operand.hbm [shape: f32[128,384], index: 0, kind: input, shape index: {}]
  %s1 = inlined_call_operand.hbm [shape: f32[128,384], index: 1, kind: input, shape index: {}]
  %s2 = inlined_call_operand.vmem [shape: f32[1,128], index: 2, kind: input, shape index: {}]
  %s3 = inlined_call_operand.<no memory space> [shape: f32[1], index: 3, kind: input, shape index: {}]
  %s4 = inlined_call_operand.vmem [shape: f32[4], index: 4, kind: input, shape index: {}]
  %s5 = inlined_call_operand.hbm [shape: f32[4,384], index: 5, kind: input, shape index: {}]
  %s6 = inlined_call_operand.hbm [shape: f32[1,384], index: 6, kind: output, shape index: {}]
  %s7 = sld [smem:[#allocation0]]
  $region73: #{tpu_custom_call.1} parent=0
    _
  %s9 = ssub.s32 1, %s7
  %s10 = scalar_select 0, %s9, %s7
  %11 = sst [smem:[#allocation2]] %s3
  $region1: #{tpu_custom_call.1} parent=0
    #allocation3 [shape = 'u8[131072]{0}', space=vmem, size = 0x20000, scoped, tag = 'input window, operand 0']
    #allocation4 [shape = 's32[2]{0}', space=sflag, size = 0x8, scoped, tag = 'scoped memory for tpu_custom_call.1']
    #allocation5 [shape = 's32[2]{0}', space=sflag, size = 0x8, scoped, tag = 'scoped memory for tpu_custom_call.1']
    #allocation6 [shape = 's32[2]{0}', space=sflag, size = 0x8, scoped, tag = 'scoped memory for tpu_custom_call.1']
    #allocation7 [shape = 'u8[131072]{0}', space=vmem, size = 0x20000, scoped, tag = 'input window, operand 1']
    #allocation8 [shape = 's32[2]{0}', space=sflag, size = 0x8, scoped, tag = 'scoped memory for tpu_custom_call.1']
    #allocation9 [shape = 'u8[512]{0}', space=smem, size = 0x200, scoped, tag = 'input window, operand 4, single buffered']
    #allocation10 [shape = 'u8[4096]{0}', space=vmem, size = 0x1000, scoped, tag = 'input window, operand 5']
    #allocation11 [shape = 'u8[1024]{0}', space=vmem, size = 0x400, scoped, tag = 'output window, operand 0']
    %12 = vsyncpa [#allocation4], 0
    %s13 = scalar_lea.sflag [#allocation4], 1
    %14 = vsyncpa %s13, 0
    %15 = vsyncpa [#allocation8], 0
    %s16 = scalar_lea.sflag [#allocation8], 1
    %17 = vsyncpa %s16, 0
    %18 = vsyncpa [#allocation6], 0
    %19 = vsyncpa [#allocation5], 0
    %s20 = scalar_lea.sflag [#allocation5], 1
    %21 = vsyncpa %s20, 0
    loop: start=0, step=1, limit=5
    $region2: #{tpu_custom_call.1} parent=1 // loop_pre_header
      _
    $region3: #{tpu_custom_call.1} parent=1 // loop_header
      %s23 = sphi 0, %s27
      %p24 = scmp.ge.s32.totalorder %s23, 5
      %s33 = sphi 0, %s35
      %s36 = sphi 0, %s33
      %s37 = sphi 0, %s36
      %s53 = sphi 0, %s37
      %s65 = sphi 0, %s67
      %s68 = sphi 0, %s65
      %s69 = sphi 0, %s68
      %s85 = sphi 0, %s69
      %s89 = sphi 0, %s89
      %s91 = sphi 0, %s89
      %s92 = sphi 0, %s91
      %s106 = sphi 0, %s92
      %s110 = sphi 0, %s110
      %s112 = sphi 0, %s110
      %s113 = sphi 0, %s112
      %s127 = sphi 0, %s113
      %s131 = sphi 0, %s131
      %s133 = sphi 0, %s131
      %s134 = sphi 0, %s133
      %s148 = sphi 0, %s134
      %s154 = sphi 0, %s156
      %s157 = sphi 0, %s154
      %s158 = sphi 0, %s157
      %s174 = sphi 0, %s158
      %s180 = sphi 0, %s182
      %s183 = sphi 0, %s180
      %s184 = sphi 0, %s183
      %s200 = sphi 0, %s184
    $region4: #{tpu_custom_call.1} parent=1 // loop_header_branch
      %26 = sbr.rel (%p24) target = $region8
    $region5: #{tpu_custom_call.1} parent=1 // loop_body
      %s28 = ssub.s32 %s23, 1
      %s29 = ssub.s32 %s23, 2
      %s30 = sadd.s32 %s23, 1
      %s31 = ssub.s32 %s23, %s30
      %p32 = scmp.eq.s32.totalorder %s31, 0
      %s34 = sadd.s32 %s33, 1
      %s35 = scalar_select %p32, %s33, %s34
      %p38 = pneg %p32
      %p39 = scmp.eq.s32.totalorder %s23, 2
      %p40 = por %p38, %p39
      %p41 = scmp.ne.s32.totalorder %s33, %s36
      %p42 = scmp.eq.s32.totalorder %s23, 0
      %p43 = por %p41, %p42
      %p44 = scmp.ne.s32.totalorder %s33, %s36
      %p45 = scmp.eq.s32.totalorder %s28, 2
      %p46 = por %p44, %p45
      %p47 = scmp.ne.s32.totalorder %s36, %s37
      %p48 = scmp.eq.s32.totalorder %s28, 0
      %p49 = por %p47, %p48
      %p50 = scmp.ne.s32.totalorder %s36, %s37
      %p51 = scmp.eq.s32.totalorder %s29, 2
      %p52 = por %p50, %p51
      %p54 = scmp.ne.s32.totalorder %s37, %s53
      %p55 = scmp.eq.s32.totalorder %s29, 0
      %p56 = por %p54, %p55
      %s57 = ssub.s32 %s23, 1
      %p58 = scmp.gt.s32.totalorder %s57, 0
      %s59 = scalar_select %p58, %s57, 0
      %s60 = ssub.s32 %s30, 1
      %p61 = scmp.gt.s32.totalorder %s60, 0
      %s62 = scalar_select %p61, %s60, 0
      %s63 = ssub.s32 %s59, %s62
      %p64 = scmp.eq.s32.totalorder %s63, 0
      %s66 = sadd.s32 %s65, 1
      %s67 = scalar_select %p64, %s65, %s66
      %p70 = pneg %p64
      %p71 = scmp.eq.s32.totalorder %s23, 2
      %p72 = por %p70, %p71
      %p73 = scmp.ne.s32.totalorder %s65, %s68
      %p74 = scmp.eq.s32.totalorder %s23, 0
      %p75 = por %p73, %p74
      %p76 = scmp.ne.s32.totalorder %s65, %s68
      %p77 = scmp.eq.s32.totalorder %s28, 2
      %p78 = por %p76, %p77
      %p79 = scmp.ne.s32.totalorder %s68, %s69
      %p80 = scmp.eq.s32.totalorder %s28, 0
      %p81 = por %p79, %p80
      %p82 = scmp.ne.s32.totalorder %s68, %s69
      %p83 = scmp.eq.s32.totalorder %s29, 2
      %p84 = por %p82, %p83
      %p86 = scmp.ne.s32.totalorder %s69, %s85
      %p87 = scmp.eq.s32.totalorder %s29, 0
      %p88 = por %p86, %p87
      %s90 = sadd.s32 %s89, 1
      %p93 = scmp.eq.s32.totalorder %s23, 2
      %p94 = scmp.ne.s32.totalorder %s89, %s91
      %p95 = scmp.eq.s32.totalorder %s23, 0
      %p96 = por %p94, %p95
      %p97 = scmp.ne.s32.totalorder %s89, %s91
      %p98 = scmp.eq.s32.totalorder %s28, 2
      %p99 = por %p97, %p98
      %p100 = scmp.ne.s32.totalorder %s91, %s92
      %p101 = scmp.eq.s32.totalorder %s28, 0
      %p102 = por %p100, %p101
      %p103 = scmp.ne.s32.totalorder %s91, %s92
      %p104 = scmp.eq.s32.totalorder %s29, 2
      %p105 = por %p103, %p104
      %p107 = scmp.ne.s32.totalorder %s92, %s106
      %p108 = scmp.eq.s32.totalorder %s29, 0
      %p109 = por %p107, %p108
      %s111 = sadd.s32 %s110, 1
      %p114 = scmp.eq.s32.totalorder %s23, 2
      %p115 = scmp.ne.s32.totalorder %s110, %s112
      %p116 = scmp.eq.s32.totalorder %s23, 0
      %p117 = por %p115, %p116
      %p118 = scmp.ne.s32.totalorder %s110, %s112
      %p119 = scmp.eq.s32.totalorder %s28, 2
      %p120 = por %p118, %p119
      %p121 = scmp.ne.s32.totalorder %s112, %s113
      %p122 = scmp.eq.s32.totalorder %s28, 0
      %p123 = por %p121, %p122
      %p124 = scmp.ne.s32.totalorder %s112, %s113
      %p125 = scmp.eq.s32.totalorder %s29, 2
      %p126 = por %p124, %p125
      %p128 = scmp.ne.s32.totalorder %s113, %s127
      %p129 = scmp.eq.s32.totalorder %s29, 0
      %p130 = por %p128, %p129
      %s132 = sadd.s32 %s131, 1
      %p135 = scmp.eq.s32.totalorder %s23, 2
      %p136 = scmp.ne.s32.totalorder %s131, %s133
      %p137 = scmp.eq.s32.totalorder %s23, 0
      %p138 = por %p136, %p137
      %p139 = scmp.ne.s32.totalorder %s131, %s133
      %p140 = scmp.eq.s32.totalorder %s28, 2
      %p141 = por %p139, %p140
      %p142 = scmp.ne.s32.totalorder %s133, %s134
      %p143 = scmp.eq.s32.totalorder %s28, 0
      %p144 = por %p142, %p143
      %p145 = scmp.ne.s32.totalorder %s133, %s134
      %p146 = scmp.eq.s32.totalorder %s29, 2
      %p147 = por %p145, %p146
      %p149 = scmp.ne.s32.totalorder %s134, %s148
      %p150 = scmp.eq.s32.totalorder %s29, 0
      %p151 = por %p149, %p150
      %s152 = ssub.s32 %s23, %s30
      %p153 = scmp.eq.s32.totalorder %s152, 0
      %s155 = sadd.s32 %s154, 1
      %s156 = scalar_select %p153, %s154, %s155
      %p159 = pneg %p153
      %p160 = scmp.eq.s32.totalorder %s23, 2
      %p161 = por %p159, %p160
      %p162 = scmp.ne.s32.totalorder %s154, %s157
      %p163 = scmp.eq.s32.totalorder %s23, 0
      %p164 = por %p162, %p163
      %p165 = scmp.ne.s32.totalorder %s154, %s157
      %p166 = scmp.eq.s32.totalorder %s28, 2
      %p167 = por %p165, %p166
      %p168 = scmp.ne.s32.totalorder %s157, %s158
      %p169 = scmp.eq.s32.totalorder %s28, 0
      %p170 = por %p168, %p169
      %p171 = scmp.ne.s32.totalorder %s157, %s158
      %p172 = scmp.eq.s32.totalorder %s29, 2
      %p173 = por %p171, %p172
      %p175 = scmp.ne.s32.totalorder %s158, %s174
      %p176 = scmp.eq.s32.totalorder %s29, 0
      %p177 = por %p175, %p176
      %s178 = ssub.s32 %s23, %s30
      %p179 = scmp.eq.s32.totalorder %s178, 0
      %s181 = sadd.s32 %s180, 1
      %s182 = scalar_select %p179, %s180, %s181
      %p185 = pneg %p179
      %p186 = scmp.eq.s32.totalorder %s23, 2
      %p187 = por %p185, %p186
      %p188 = scmp.ne.s32.totalorder %s180, %s183
      %p189 = scmp.eq.s32.totalorder %s23, 0
      %p190 = por %p188, %p189
      %p191 = scmp.ne.s32.totalorder %s180, %s183
      %p192 = scmp.eq.s32.totalorder %s28, 2
      %p193 = por %p191, %p192
      %p194 = scmp.ne.s32.totalorder %s183, %s184
      %p195 = scmp.eq.s32.totalorder %s28, 0
      %p196 = por %p194, %p195
      %p197 = scmp.ne.s32.totalorder %s183, %s184
      %p198 = scmp.eq.s32.totalorder %s29, 2
      %p199 = por %p197, %p198
      %p201 = scmp.ne.s32.totalorder %s184, %s200
      %p202 = scmp.eq.s32.totalorder %s29, 0
      %p203 = por %p201, %p202
      %p204 = scmp.le.s32.totalorder 1, %s23
      %p205 = scmp.lt.s32.totalorder %s23, 4
      %p206 = pnand %p204, %p205
      %p207 = pneg %p206
      // Predicated region
      $region9: #{tpu_custom_call.1} parent=5 // pred_check
        _
      $region10: #{tpu_custom_call.1} parent=5 // pred_check_branch
        %209 = sbr.rel (%p206) target = $region12
      $region11: #{tpu_custom_call.1} parent=5 // pred_region
        %s210 = ssub.s32 %s23, 1
        // Predicated region
        $region13: #{tpu_custom_call.1} parent=11 // pred_check
          %p211 = pneg %p102
        $region14: #{tpu_custom_call.1} parent=11 // pred_check_branch
          %213 = sbr.rel (%p211) target = $region16
        $region15: #{tpu_custom_call.1} parent=11 // pred_region
          _
        $region16: #{tpu_custom_call.1} parent=11 // pred_fallthru
          _
        // Predicated region
        $region17: #{tpu_custom_call.1} parent=11 // pred_check
          %p214 = pneg %p123
        $region18: #{tpu_custom_call.1} parent=11 // pred_check_branch
          %216 = sbr.rel (%p214) target = $region20
        $region19: #{tpu_custom_call.1} parent=11 // pred_region
          _
        $region20: #{tpu_custom_call.1} parent=11 // pred_fallthru
          _
        // Predicated region
        $region21: #{tpu_custom_call.1} parent=11 // pred_check
          %p217 = pneg %p144
        $region22: #{tpu_custom_call.1} parent=11 // pred_check_branch
          %219 = sbr.rel (%p217) target = $region24
        $region23: #{tpu_custom_call.1} parent=11 // pred_region
          %s221 = ssub.s32 16, 16
          %222 = vsyncadd [#allocation6], %s221
          %s224 = sshll.u32 %s4, 4
          %s225 = int_to_ptr.vmem [resolvable:$true] %s224
          %227 = dma.vmem_to_smem %s225, 16, [#allocation9], [#allocation6]
        $region24: #{tpu_custom_call.1} parent=11 // pred_fallthru
          _
      $region12: #{tpu_custom_call.1} parent=5 // pred_fallthru
        _
      %p228 = scmp.lt.s32.totalorder %s23, 3
      // Predicated region
      $region25: #{tpu_custom_call.1} parent=5 // pred_check
        %p229 = pneg %p228
      $region26: #{tpu_custom_call.1} parent=5 // pred_check_branch
        %231 = sbr.rel (%p229) target = $region28
      $region27: #{tpu_custom_call.1} parent=5 // pred_region
        // Predicated region
        $region29: #{tpu_custom_call.1} parent=27 // pred_check
          %p232 = pneg %p43
        $region30: #{tpu_custom_call.1} parent=27 // pred_check_branch
          %234 = sbr.rel (%p232) target = $region32
        $region31: #{tpu_custom_call.1} parent=27 // pred_region
          %s235 = sand.u32 %s33, 1
          %s236 = scalar_lea.sflag [#allocation4], %s235
          %s237 = sand.u32 %s33, 1
          %s238 = smul.addr %s237, 128
          %s239 = scalar_lea.vmem [#allocation3], %s238
          %s241 = ssub.s32 2048, 2048
          %242 = vsyncadd %s236, %s241
          %s243 = smul.addr %s23, 128
          %s244 = scalar_lea.hbm %s0, %s243
          %s245 = sshll.u32 %s239, 4
          %s246 = int_to_ptr.vmem [resolvable:$true] %s245
          %251 = dma.hbm_to_vmem [thread:$0]  %s244, 2048, %s246, %s236, 384, 128, 8
        $region32: #{tpu_custom_call.1} parent=27 // pred_fallthru
          _
        // Predicated region
        $region33: #{tpu_custom_call.1} parent=27 // pred_check
          %p252 = pneg %p75
        $region34: #{tpu_custom_call.1} parent=27 // pred_check_branch
          %254 = sbr.rel (%p252) target = $region36
        $region35: #{tpu_custom_call.1} parent=27 // pred_region
          %s255 = sand.u32 %s23, 1
          %s256 = scalar_lea.sflag [#allocation8], %s255
          %s257 = sand.u32 %s65, 1
          %s258 = smul.addr %s257, 128
          %s259 = scalar_lea.vmem [#allocation7], %s258
          %s260 = ssub.s32 %s23, 1
          %p261 = scmp.gt.s32.totalorder %s260, 0
          %s262 = scalar_select %p261, %s260, 0
          %s264 = ssub.s32 2048, 2048
          %265 = vsyncadd %s256, %s264
          %s266 = smul.addr %s262, 128
          %s267 = scalar_lea.hbm %s1, %s266
          %s268 = sshll.u32 %s259, 4
          %s269 = int_to_ptr.vmem [resolvable:$true] %s268
          %274 = dma.hbm_to_vmem [thread:$0]  %s267, 2048, %s269, %s256, 384, 128, 8
        $region36: #{tpu_custom_call.1} parent=27 // pred_fallthru
          _
        // Predicated region
        $region37: #{tpu_custom_call.1} parent=27 // pred_check
          %p275 = pneg %p164
        $region38: #{tpu_custom_call.1} parent=27 // pred_check_branch
          %277 = sbr.rel (%p275) target = $region40
        $region39: #{tpu_custom_call.1} parent=27 // pred_region
          %s278 = sand.u32 %s23, 1
          %s279 = scalar_lea.sflag [#allocation8], %s278
          %s280 = sand.u32 %s154, 1
          %s281 = smul.addr %s280, 4
          %s282 = scalar_lea.vmem [#allocation10], %s281
          %s284 = ssub.s32 64, 64
          %285 = vsyncadd %s279, %s284
          %s286 = smul.addr %s23, 64
          %s287 = scalar_lea.hbm %s5, %s286
          %s289 = sshll.u32 %s282, 4
          %s290 = int_to_ptr.vmem [resolvable:$true] %s289
          %292 = dma.hbm_to_vmem [thread:$0]  %s287, 64, %s290, %s279
        $region40: #{tpu_custom_call.1} parent=27 // pred_fallthru
          _
      $region28: #{tpu_custom_call.1} parent=5 // pred_fallthru
        _
      %p293 = scmp.le.s32.totalorder 1, %s23
      %p294 = scmp.lt.s32.totalorder %s23, 4
      %p295 = pnand %p293, %p294
      %p296 = pneg %p295
      // Predicated region
      $region41: #{tpu_custom_call.1} parent=5 // pred_check
        _
      $region42: #{tpu_custom_call.1} parent=5 // pred_check_branch
        %298 = sbr.rel (%p295) target = $region44
      $region43: #{tpu_custom_call.1} parent=5 // pred_region
        %s299 = ssub.s32 %s23, 1
        %s300 = sand.u32 %s36, 1
        %s301 = scalar_lea.sflag [#allocation4], %s300
        %s302 = sand.u32 %s36, 1
        %s303 = smul.addr %s302, 128
        %s304 = scalar_lea.vmem [#allocation3], %s303
        // Predicated region
        $region45: #{tpu_custom_call.1} parent=43 // pred_check
          %p305 = pneg %p49
        $region46: #{tpu_custom_call.1} parent=43 // pred_check_branch
          %307 = sbr.rel (%p305) target = $region48
        $region47: #{tpu_custom_call.1} parent=43 // pred_region
          %308 = dma.done %s301, 2048
        $region48: #{tpu_custom_call.1} parent=43 // pred_fallthru
          _
        %s309 = sand.u32 %s28, 1
        %s310 = scalar_lea.sflag [#allocation8], %s309
        %s311 = sand.u32 %s68, 1
        %s312 = smul.addr %s311, 128
        %s313 = scalar_lea.vmem [#allocation7], %s312
        // Predicated region
        $region49: #{tpu_custom_call.1} parent=43 // pred_check
          %p314 = pneg %p81
        $region50: #{tpu_custom_call.1} parent=43 // pred_check_branch
          %316 = sbr.rel (%p314) target = $region52
        $region51: #{tpu_custom_call.1} parent=43 // pred_region
          %317 = dma.done %s310, 2048
        $region52: #{tpu_custom_call.1} parent=43 // pred_fallthru
          _
        // Predicated region
        $region53: #{tpu_custom_call.1} parent=43 // pred_check
          %p318 = pneg %p144
        $region54: #{tpu_custom_call.1} parent=43 // pred_check_branch
          %320 = sbr.rel (%p318) target = $region56
        $region55: #{tpu_custom_call.1} parent=43 // pred_region
          %321 = dma.done [#allocation6], 16
        $region56: #{tpu_custom_call.1} parent=43 // pred_fallthru
          _
        %s322 = sand.u32 %s28, 1
        %s323 = scalar_lea.sflag [#allocation8], %s322
        %s324 = sand.u32 %s157, 1
        %s325 = smul.addr %s324, 4
        %s326 = scalar_lea.vmem [#allocation10], %s325
        // Predicated region
        $region57: #{tpu_custom_call.1} parent=43 // pred_check
          %p327 = pneg %p170
        $region58: #{tpu_custom_call.1} parent=43 // pred_check_branch
          %329 = sbr.rel (%p327) target = $region60
        $region59: #{tpu_custom_call.1} parent=43 // pred_region
          %330 = dma.done %s323, 64
        $region60: #{tpu_custom_call.1} parent=43 // pred_fallthru
          _
        %331 = sfence
        %s332 = sand.u32 %s36, 1
        %s333 = scalar_lea.sflag [#allocation4], %s332
        %s334 = sand.u32 %s36, 1
        %s335 = smul.addr %s334, 128
        %s336 = scalar_lea.vmem [#allocation3], %s335
        %p337 = pneg %p49
        %p338 = pneg %p46
        %s339 = sand.u32 %s28, 1
        %s340 = scalar_lea.sflag [#allocation8], %s339
        %s341 = sand.u32 %s68, 1
        %s342 = smul.addr %s341, 128
        %s343 = scalar_lea.vmem [#allocation7], %s342
        %p344 = pneg %p81
        %p345 = pneg %p78
        %p346 = pneg %p102
        %p347 = pneg %p99
        %p348 = pneg %p123
        %p349 = pneg %p120
        %p350 = pneg %p144
        %p351 = pneg %p141
        %s352 = sand.u32 %s28, 1
        %s353 = scalar_lea.sflag [#allocation8], %s352
        %s354 = sand.u32 %s157, 1
        %s355 = smul.addr %s354, 4
        %s356 = scalar_lea.vmem [#allocation10], %s355
        %p357 = pneg %p170
        %p358 = pneg %p167
        %p359 = pneg %p196
        %p360 = pneg %p193
        %s361 = sand.u32 %s183, 1
        %s362 = scalar_lea.sflag [#allocation5], %s361
        %s363 = sand.u32 %s183, 1
        %s364 = scalar_lea.vmem [#allocation11], %s363
        %s365 = ssub.s32 %s28, 1
        %p366 = scmp.gt.s32.totalorder %s365, 0
        %s367 = scalar_select %p366, %s365, 0
        %v368 = vld [vmem:[%s2] sm:$0x1]
        %s369 = sld [smem:[#allocation2]]
        %v370 = vld [vmem:[%s304] sm:$0xff]
        %v371 = vld [vmem:[%s304 + $0x8] sm:$0xff]
        %v372 = vld [vmem:[%s304 + $0x10] sm:$0xff]
        %v373 = vld [vmem:[%s304 + $0x18] sm:$0xff]
        %v374 = vld [vmem:[%s304 + $0x20] sm:$0xff]
        %v375 = vld [vmem:[%s304 + $0x28] sm:$0xff]
        %v376 = vld [vmem:[%s304 + $0x30] sm:$0xff]
        %v377 = vld [vmem:[%s304 + $0x38] sm:$0xff]
        %v378 = vld [vmem:[%s304 + $0x40] sm:$0xff]
        %v379 = vld [vmem:[%s304 + $0x48] sm:$0xff]
        %v380 = vld [vmem:[%s304 + $0x50] sm:$0xff]
        %v381 = vld [vmem:[%s304 + $0x58] sm:$0xff]
        %v382 = vld [vmem:[%s304 + $0x60] sm:$0xff]
        %v383 = vld [vmem:[%s304 + $0x68] sm:$0xff]
        %v384 = vld [vmem:[%s304 + $0x70] sm:$0xff]
        %v385 = vld [vmem:[%s304 + $0x78] sm:$0xff]
        %v386 = vstv %s369
        %387 = vmatprep.subr.mxu0 0.0
        %388 = vmatpush1.msra.mxu0 %v385
        %389 = vmatprep.subr.mxu0 0.0
        %390 = vmatpush1.msra.mxu0 %v384
        %391 = vmatprep.subr.mxu0 0.0
        %392 = vmatpush1.msra.mxu0 %v383
        %393 = vmatprep.subr.mxu0 0.0
        %394 = vmatpush1.msra.mxu0 %v382
        %395 = vmatprep.subr.mxu0 0.0
        %396 = vmatpush1.msra.mxu0 %v381
        %397 = vmatprep.subr.mxu0 0.0
        %398 = vmatpush1.msra.mxu0 %v380
        %399 = vmatprep.subr.mxu0 0.0
        %400 = vmatpush1.msra.mxu0 %v379
        %401 = vmatprep.subr.mxu0 0.0
        %402 = vmatpush1.msra.mxu0 %v378
        %403 = vmatprep.subr.mxu0 0.0
        %404 = vmatpush1.msra.mxu0 %v377
        %405 = vmatprep.subr.mxu0 0.0
        %406 = vmatpush1.msra.mxu0 %v376
        %407 = vmatprep.subr.mxu0 0.0
        %408 = vmatpush1.msra.mxu0 %v375
        %409 = vmatprep.subr.mxu0 0.0
        %410 = vmatpush1.msra.mxu0 %v374
        %411 = vmatprep.subr.mxu0 0.0
        %412 = vmatpush1.msra.mxu0 %v373
        %413 = vmatprep.subr.mxu0 0.0
        %414 = vmatpush1.msra.mxu0 %v372
        %415 = vmatprep.subr.mxu0 0.0
        %416 = vmatpush1.msra.mxu0 %v371
        %417 = vmatprep.subr.mxu0 0.0
        %418 = vmatpush1.msra.mxu0 %v370
        %419 = vmatprep.subr.mxu0 0.0
        %420 = vmatpush2.msra.mxu0 0.0
        %421 = vmatprep.subr.mxu0 0.0
        %422 = vmatpush2.msra.mxu0 0.0
        %423 = vmatprep.subr.mxu0 0.0
        %424 = vmatpush2.msra.mxu0 0.0
        %425 = vmatprep.subr.mxu0 0.0
        %426 = vmatpush2.msra.mxu0 0.0
        %427 = vmatprep.subr.mxu0 0.0
        %428 = vmatpush2.msra.mxu0 0.0
        %429 = vmatprep.subr.mxu0 0.0
        %430 = vmatpush2.msra.mxu0 0.0
        %431 = vmatprep.subr.mxu0 0.0
        %432 = vmatpush2.msra.mxu0 0.0
        %433 = vmatprep.subr.mxu0 0.0
        %434 = vmatpush2.msra.mxu0 0.0
        %435 = vmatprep.subr.mxu0 0.0
        %436 = vmatpush2.msra.mxu0 0.0
        %437 = vmatprep.subr.mxu0 0.0
        %438 = vmatpush2.msra.mxu0 0.0
        %439 = vmatprep.subr.mxu0 0.0
        %440 = vmatpush2.msra.mxu0 0.0
        %441 = vmatprep.subr.mxu0 0.0
        %442 = vmatpush2.msra.mxu0 0.0
        %443 = vmatprep.subr.mxu0 0.0
        %444 = vmatpush2.msra.mxu0 0.0
        %445 = vmatprep.subr.mxu0 0.0
        %446 = vmatpush2.msra.mxu0 0.0
        %447 = vmatprep.subr.mxu0 0.0
        %448 = vmatpush2.msra.mxu0 0.0
        %449 = vmatprep.subr.mxu0 0.0
        %450 = vmatpush2.msra.mxu0 0.0
        %451 = vmatprep.mubr.f32.mxu0 0.0
        %452 = vmatmul.mubr.f32.gmra.mxu0 %v368
        %v453 = vpop.f32.mrf.mxu0
        %v454 = vadd.f32 %v386, %v453
        %v455 = vpop.f32.mrf.mxu0
        %456 = vdwg.mxu0
        %v457 = vxor.u32 %v454, 2147483648
        %v458 = vmul.f32 %v457, 1.442695
        %v459 = vpow.pop %v458
        %v460 = vadd.f32 %v459, 1.0
        %v461 = vrcp.pop %v460
        %v462 = vmul.f32 1.0, %v461
        %v463 = vld [vmem:[%s313] sm:$0xff]
        %v464 = vld [vmem:[%s313 + $0x8] sm:$0xff]
        %v465 = vld [vmem:[%s313 + $0x10] sm:$0xff]
        %v466 = vld [vmem:[%s313 + $0x18] sm:$0xff]
        %v467 = vld [vmem:[%s313 + $0x20] sm:$0xff]
        %v468 = vld [vmem:[%s313 + $0x28] sm:$0xff]
        %v469 = vld [vmem:[%s313 + $0x30] sm:$0xff]
        %v470 = vld [vmem:[%s313 + $0x38] sm:$0xff]
        %v471 = vld [vmem:[%s313 + $0x40] sm:$0xff]
        %v472 = vld [vmem:[%s313 + $0x48] sm:$0xff]
        %v473 = vld [vmem:[%s313 + $0x50] sm:$0xff]
        %v474 = vld [vmem:[%s313 + $0x58] sm:$0xff]
        %v475 = vld [vmem:[%s313 + $0x60] sm:$0xff]
        %v476 = vld [vmem:[%s313 + $0x68] sm:$0xff]
        %v477 = vld [vmem:[%s313 + $0x70] sm:$0xff]
        %v478 = vld [vmem:[%s313 + $0x78] sm:$0xff]
        %479 = vmatprep.subr.mxu0 0.0
        %480 = vmatpush1.msra.mxu0 %v478
        %481 = vmatprep.subr.mxu0 0.0
        %482 = vmatpush1.msra.mxu0 %v477
        %483 = vmatprep.subr.mxu0 0.0
        %484 = vmatpush1.msra.mxu0 %v476
        %485 = vmatprep.subr.mxu0 0.0
        %486 = vmatpush1.msra.mxu0 %v475
        %487 = vmatprep.subr.mxu0 0.0
        %488 = vmatpush1.msra.mxu0 %v474
        %489 = vmatprep.subr.mxu0 0.0
        %490 = vmatpush1.msra.mxu0 %v473
        %491 = vmatprep.subr.mxu0 0.0
        %492 = vmatpush1.msra.mxu0 %v472
        %493 = vmatprep.subr.mxu0 0.0
        %494 = vmatpush1.msra.mxu0 %v471
        %495 = vmatprep.subr.mxu0 0.0
        %496 = vmatpush1.msra.mxu0 %v470
        %497 = vmatprep.subr.mxu0 0.0
        %498 = vmatpush1.msra.mxu0 %v469
        %499 = vmatprep.subr.mxu0 0.0
        %500 = vmatpush1.msra.mxu0 %v468
        %501 = vmatprep.subr.mxu0 0.0
        %502 = vmatpush1.msra.mxu0 %v467
        %503 = vmatprep.subr.mxu0 0.0
        %504 = vmatpush1.msra.mxu0 %v466
        %505 = vmatprep.subr.mxu0 0.0
        %506 = vmatpush1.msra.mxu0 %v465
        %507 = vmatprep.subr.mxu0 0.0
        %508 = vmatpush1.msra.mxu0 %v464
        %509 = vmatprep.subr.mxu0 0.0
        %510 = vmatpush1.msra.mxu0 %v463
        %511 = vmatprep.subr.mxu0 0.0
        %512 = vmatpush2.msra.mxu0 0.0
        %513 = vmatprep.subr.mxu0 0.0
        %514 = vmatpush2.msra.mxu0 0.0
        %515 = vmatprep.subr.mxu0 0.0
        %516 = vmatpush2.msra.mxu0 0.0
        %517 = vmatprep.subr.mxu0 0.0
        %518 = vmatpush2.msra.mxu0 0.0
        %519 = vmatprep.subr.mxu0 0.0
        %520 = vmatpush2.msra.mxu0 0.0
        %521 = vmatprep.subr.mxu0 0.0
        %522 = vmatpush2.msra.mxu0 0.0
        %523 = vmatprep.subr.mxu0 0.0
        %524 = vmatpush2.msra.mxu0 0.0
        %525 = vmatprep.subr.mxu0 0.0
        %526 = vmatpush2.msra.mxu0 0.0
        %527 = vmatprep.subr.mxu0 0.0
        %528 = vmatpush2.msra.mxu0 0.0
        %529 = vmatprep.subr.mxu0 0.0
        %530 = vmatpush2.msra.mxu0 0.0
        %531 = vmatprep.subr.mxu0 0.0
        %532 = vmatpush2.msra.mxu0 0.0
        %533 = vmatprep.subr.mxu0 0.0
        %534 = vmatpush2.msra.mxu0 0.0
        %535 = vmatprep.subr.mxu0 0.0
        %536 = vmatpush2.msra.mxu0 0.0
        %537 = vmatprep.subr.mxu0 0.0
        %538 = vmatpush2.msra.mxu0 0.0
        %539 = vmatprep.subr.mxu0 0.0
        %540 = vmatpush2.msra.mxu0 0.0
        %541 = vmatprep.subr.mxu0 0.0
        %542 = vmatpush2.msra.mxu0 0.0
        %543 = vmatprep.mubr.f32.mxu0 0.0
        %544 = vmatmul.mubr.f32.gmra.mxu0 %v368
        %v545 = vpop.f32.mrf.mxu0
        %v546 = vadd.f32 %v386, %v545
        %v547 = vpop.f32.mrf.mxu0
        %548 = vdwg.mxu0
        %v549 = vxor.u32 %v546, 2147483648
        %v550 = vmul.f32 %v549, 1.442695
        %v551 = vpow.pop %v550
        %v552 = vadd.f32 %v551, 1.0
        %v553 = vrcp.pop %v552
        %v554 = vmul.f32 1.0, %v553
        %p555 = scmp.gt.s32.totalorder %s28, 0
        %s556 = scalar_select %p555, 1, 0
        %s557 = scvt.s32.f32 %s556
        %v558 = vstv %s557
        %v559 = vmul.f32 %v554, %v558
        %v560 = vld [vmem:[%s326] sm:$0x1]
        %563 = vrot.lane.b32.xlu0 %v559, 4
        %v564 = vpop.permute.xlu0 %563
        %565 = vrot.lane.b32.xlu0 %v462, 4
        %v566 = vpop.permute.xlu0 %565
        %vm567 = vcmask 31744
        %v568 = vsel %vm567, %v564, %v566
        %vm570 = vcmp.lt.f32.partialorder %v560, %v568
        %v571 = vsel %vm570, 1, 0
        %v572 = vcvt.s32.f32 %v571
        %s573 = sld [smem:[#allocation9]]
        %v574 = vstv %s573
        %v575 = vmul.f32 %v574, %v572
        %v576 = vadd.f32 %v575, 0.0
        %v577 = vld [vmem:[%s326 + $0x1] sm:$0x1]
        %578 = vrot.lane.b32.xlu0 %v559, 3
        %v579 = vpop.permute.xlu0 %578
        %580 = vrot.lane.b32.xlu0 %v462, 3
        %v581 = vpop.permute.xlu0 %580
        %vm582 = vcmask 23552
        %v583 = vsel %vm582, %v579, %v581
        %vm585 = vcmp.lt.f32.partialorder %v577, %v583
        %v586 = vsel %vm585, 1, 0
        %v587 = vcvt.s32.f32 %v586
        %s588 = sld [smem:[#allocation9 + $0x1]]
        %v589 = vstv %s588
        %v590 = vmul.f32 %v589, %v587
        %v591 = vadd.f32 %v576, %v590
        %v592 = vld [vmem:[%s326 + $0x2] sm:$0x1]
        %593 = vrot.lane.b32.xlu0 %v559, 2
        %v594 = vpop.permute.xlu0 %593
        %595 = vrot.lane.b32.xlu0 %v462, 2
        %v596 = vpop.permute.xlu0 %595
        %vm597 = vcmask 15360
        %v598 = vsel %vm597, %v594, %v596
        %vm600 = vcmp.lt.f32.partialorder %v592, %v598
        %v601 = vsel %vm600, 1, 0
        %v602 = vcvt.s32.f32 %v601
        %s603 = sld [smem:[#allocation9 + $0x2]]
        %v604 = vstv %s603
        %v605 = vmul.f32 %v604, %v602
        %v606 = vadd.f32 %v591, %v605
        %v607 = vld [vmem:[%s326 + $0x3] sm:$0x1]
        %608 = vrot.lane.b32.xlu0 %v559, 1
        %v609 = vpop.permute.xlu0 %608
        %610 = vrot.lane.b32.xlu0 %v462, 1
        %v611 = vpop.permute.xlu0 %610
        %vm612 = vcmask 7168
        %v613 = vsel %vm612, %v609, %v611
        %vm615 = vcmp.lt.f32.partialorder %v607, %v613
        %v616 = vsel %vm615, 1, 0
        %v617 = vcvt.s32.f32 %v616
        %s618 = sld [smem:[#allocation9 + $0x3]]
        %v619 = vstv %s618
        %v620 = vmul.f32 %v619, %v617
        %v621 = vadd.f32 %v606, %v620
        %v622 = vadd.f32 %v454, %v621
        %v623 = vxor.u32 %v622, 2147483648
        %v624 = vmul.f32 %v623, 1.442695
        %v625 = vpow.pop %v624
        %v626 = vadd.f32 %v625, 1.0
        %v627 = vrcp.pop %v626
        %v628 = vmul.f32 1.0, %v627
        %629 = vst [vmem:[%s364] sm:$0x1] %v628
        %s630 = sand.u32 %s183, 1
        %s631 = scalar_lea.sflag [#allocation5], %s630
        %s632 = sand.u32 %s183, 1
        %s633 = scalar_lea.vmem [#allocation11], %s632
        // Predicated region
        $region61: #{tpu_custom_call.1} parent=43 // pred_check
          %p634 = pneg %p193
        $region62: #{tpu_custom_call.1} parent=43 // pred_check_branch
          %636 = sbr.rel (%p634) target = $region64
        $region63: #{tpu_custom_call.1} parent=43 // pred_region
          %s638 = ssub.s32 16, 16
          %639 = vsyncadd %s631, %s638
          %s640 = smul.addr %s28, 16
          %s641 = scalar_lea.hbm %s6, %s640
          %s643 = sshll.u32 %s633, 4
          %s644 = int_to_ptr.vmem [resolvable:$true] %s643
          %646 = dma.vmem_to_hbm [thread:$0]  %s644, 16, %s641, %s631
        $region64: #{tpu_custom_call.1} parent=43 // pred_fallthru
          _
      $region44: #{tpu_custom_call.1} parent=5 // pred_fallthru
        _
      %p647 = scmp.le.s32.totalorder 2, %s23
      // Predicated region
      $region65: #{tpu_custom_call.1} parent=5 // pred_check
        %p648 = pneg %p647
      $region66: #{tpu_custom_call.1} parent=5 // pred_check_branch
        %650 = sbr.rel (%p648) target = $region68
      $region67: #{tpu_custom_call.1} parent=5 // pred_region
        %s651 = ssub.s32 %s23, 2
        // Predicated region
        $region69: #{tpu_custom_call.1} parent=67 // pred_check
          %p652 = pneg %p199
        $region70: #{tpu_custom_call.1} parent=67 // pred_check_branch
          %654 = sbr.rel (%p652) target = $region72
        $region71: #{tpu_custom_call.1} parent=67 // pred_region
          %s655 = sand.u32 %s184, 1
          %s656 = scalar_lea.sflag [#allocation5], %s655
          %s657 = sand.u32 %s184, 1
          %s658 = scalar_lea.vmem [#allocation11], %s657
          %659 = dma.done %s656, 16
        $region72: #{tpu_custom_call.1} parent=67 // pred_fallthru
          _
      $region68: #{tpu_custom_call.1} parent=5 // pred_fallthru
        _
    $region6: #{tpu_custom_call.1} parent=1 // loop_footer
      %s27 = sadd.s32 1, %s23
    $region7: #{tpu_custom_call.1} parent=1 // loop_footer_branch
      %22 = sbr.rel target = $region3
    $region8: #{tpu_custom_call.1} parent=1 // loop_exit
      _
    %660 = vsyncpa [#allocation4], 1
    %s661 = scalar_lea.sflag [#allocation4], 1
    %662 = vsyncpa %s661, 1
    %663 = vsyncpa [#allocation8], 1
    %s664 = scalar_lea.sflag [#allocation8], 1
    %665 = vsyncpa %s664, 1
    %666 = vsyncpa [#allocation5], 1
    %s667 = scalar_lea.sflag [#allocation5], 1
    %668 = vsyncpa %s667, 1
    %669 = vsyncpa [#allocation6], 1
    %s670 = scalar_lea.sflag [#allocation6], 1
    %671 = vsyncpa %s670, 1

</llo_original>
